<compile_context>
chip_gen: v5e
topology: v5e:2x2
jax: 0.10.0
libtpu: 0.0.40
codegen_flags: <defaults>
</compile_context>

<pallas_src>
import functools

import jax
import jax.numpy as jnp
from jax.experimental import pallas as pl
from jax.experimental.pallas import tpu as pltpu


def _rp_pool_kernel(w_ref, x_ref, o_ref, *, n_rank, nb2):
    # w_ref: (R, 2*nb2, C)  per-rank [W_E ; W_F] rows (W_E already scaled by 1/R)
    # x_ref: (C, tn)        one (batch, T-tile) block of the native (B, C, T) input
    # o_ref: (nb2, tn)      matching block of the native (B, nb2, T) output
    x = x_ref[...]
    acc = None
    for r in range(n_rank):  # static, small R
        y = jnp.dot(w_ref[r], x, preferred_element_type=jnp.float32)  # (2*nb2, tn)
        zr = y[:nb2] * y[nb2:]          # sublane-aligned slices (nb2 % 8 == 0)
        acc = zr if acc is None else acc + zr
    o_ref[...] = acc.astype(o_ref.dtype)


def rp_learnable_pooling(x, E, F, *, tile_n=2048, compute_dtype=None,
                         out_dtype=None):
    """x: (B, C, T); E, F: (R, C, nb). Returns (B, nb^2, T).

    tile_n must be a multiple of 128 (only used when T > tile_n).
    compute_dtype: optional (e.g. jnp.bfloat16) dtype for the MXU inputs.
    out_dtype: output dtype (default float32, matching the PyTorch module).
    """
    B, C, T = x.shape
    R, C_e, nb = E.shape
    assert C_e == C and F.shape == E.shape
    nb2 = nb * nb
    assert tile_n % 128 == 0, "tile_n must be a multiple of 128"
    out_dtype = jnp.float32 if out_dtype is None else out_dtype

    # --- fold selection + 1/R into per-rank weights (tiny, done once) -------
    we = jnp.repeat(jnp.transpose(E, (0, 2, 1)), nb, axis=1) / float(R)  # (R, nb2, C)
    wf = jnp.tile(jnp.transpose(F, (0, 2, 1)), (1, nb, 1))               # (R, nb2, C)
    w = jnp.concatenate([we, wf], axis=1)                                # (R, 2*nb2, C)

    if compute_dtype is not None:
        w = w.astype(compute_dtype)
        x = x.astype(compute_dtype)

    # --- tiling over the native layouts; no transposes, no padding ----------
    # Full-extent T block when it fits (legal even if T % 128 != 0); otherwise
    # 128-multiple tiles with a Pallas-handled partial last block.
    tn = T if T <= tile_n else tile_n
    grid = (B, pl.cdiv(T, tn))

    kernel = functools.partial(_rp_pool_kernel, n_rank=R, nb2=nb2)

    out = pl.pallas_call(
        kernel,
        out_shape=jax.ShapeDtypeStruct((B, nb2, T), out_dtype),
        grid_spec=pltpu.PrefetchScalarGridSpec(
            num_scalar_prefetch=0,
            grid=grid,
            in_specs=[
                # Weights: constant block index -> resident in VMEM for the grid.
                pl.BlockSpec((R, 2 * nb2, C), lambda b, j: (0, 0, 0)),
                # Native (B, C, T) input; batch dim squeezed out of the kernel Ref.
                pl.BlockSpec((None, C, tn), lambda b, j: (b, 0, j)),
            ],
            out_specs=pl.BlockSpec((None, nb2, tn), lambda b, j: (b, 0, j)),
        ),
        compiler_params=pltpu.CompilerParams(
            dimension_semantics=("parallel", "parallel"),
        ),
    )(w, x)
    return out


def _reference(x, E, F):
    # Pure-JAX mirror of the PyTorch forward for validation.
    R = E.shape[0]
    B, C, T = x.shape
    nb = E.shape[2]
    xt = jnp.transpose(x, (0, 2, 1))                          # (B, T, C)
    z = 0.0
    for r in range(R):
        xe = xt @ E[r]                                        # (B, T, nb)
        xf = xt @ F[r]                                        # (B, T, nb)
        zr = (xe[..., :, None] * xf[..., None, :]).reshape(B, T, nb * nb)
        z = z + jnp.transpose(zr, (0, 2, 1))                  # (B, nb^2, T)
    return z / float(R)


if __name__ == "__main__":
    in_dim = 64          # fixed by the module
    n_basis = 8

    key = jax.random.PRNGKey(0)

    # Case 1: small shapes, multi-rank accumulation, f32 (module semantics).
    batch, seq, n_rank = 2, 16, 2
    kx, ke, kf, key = jax.random.split(key, 4)
    x = jax.random.normal(kx, (batch, in_dim, seq), dtype=jnp.float32)
    E = jax.random.normal(ke, (n_rank, in_dim, n_basis), dtype=jnp.float32)
    F = jax.random.normal(kf, (n_rank, in_dim, n_basis), dtype=jnp.float32)

    out = jax.block_until_ready(rp_learnable_pooling(x, E, F))
    ref = _reference(x, E, F)
    assert out.shape == (batch, n_basis * n_basis, seq)
    assert jnp.allclose(out, ref, atol=1e-3, rtol=1e-3), "f32 mismatch (case 1)"

    # Case 2: longer sequence, small tile -> multi-tile T grid with a partial
    # last block (exercises the OOB-read-pad / OOB-write-drop path).
    batch2, seq2, n_rank2 = 3, 300, 1
    kx2, ke2, kf2, key = jax.random.split(key, 4)
    x2 = jax.random.normal(kx2, (batch2, in_dim, seq2), dtype=jnp.float32)
    E2 = jax.random.normal(ke2, (n_rank2, in_dim, n_basis), dtype=jnp.float32)
    F2 = jax.random.normal(kf2, (n_rank2, in_dim, n_basis), dtype=jnp.float32)

    out2 = jax.block_until_ready(rp_learnable_pooling(x2, E2, F2, tile_n=128))
    ref2 = _reference(x2, E2, F2)
    assert out2.shape == (batch2, n_basis * n_basis, seq2)
    assert jnp.allclose(out2, ref2, atol=1e-3, rtol=1e-3), "f32 mismatch (case 2)"

    # Case 3: same data, default tile (T <= tile_n -> single full-extent T block).
    out3 = jax.block_until_ready(rp_learnable_pooling(x2, E2, F2))
    assert jnp.allclose(out3, ref2, atol=1e-3, rtol=1e-3), "f32 mismatch (case 3)"

    # Case 4: bf16 compute dtype (f32 MXU accumulation), f32 output, loose tol.
    out_bf16 = jax.block_until_ready(
        rp_learnable_pooling(x, E, F, compute_dtype=jnp.bfloat16))
    assert jnp.allclose(out_bf16, ref, atol=2.0, rtol=5e-2), "bf16 mismatch"

    # Case 5: bf16 compute + bf16 output (min-HBM path), loose tol.
    out_bf16o = jax.block_until_ready(
        rp_learnable_pooling(x, E, F, compute_dtype=jnp.bfloat16,
                             out_dtype=jnp.bfloat16))
    assert out_bf16o.dtype == jnp.bfloat16
    assert jnp.allclose(out_bf16o.astype(jnp.float32), ref,
                        atol=2.0, rtol=5e-2), "bf16-out mismatch"

    print("KERNEL_OK")
</pallas_src>

<mosaic_0001>
module attributes {stable_mosaic.version = 11 : i64} {
  func.func @_rp_pool_kernel(%arg0: i32, %arg1: i32, %arg2: memref<2x128x64xf32, #tpu.memory_space<vmem>>, %arg3: memref<1x64x16xf32, #tpu.memory_space<vmem>>, %arg4: memref<1x64x16xf32, #tpu.memory_space<vmem>>) attributes {dimension_semantics = [#tpu.dimension_semantics<parallel>, #tpu.dimension_semantics<parallel>], iteration_bounds = array<i64: 2, 1>, scalar_prefetch = 0 : i64, scratch_operands = 0 : i64, tpu.core_type = #tpu.core_type<tc>, window_params = [{pipeline_mode = #tpu.pipeline_mode<synchronous>, transform_indices = @transform_0, window_bounds = array<i64: 2, 128, 64>}, {transform_indices = @transform_1, window_bounds = array<i64: 1, 64, 16>}, {transform_indices = @transform_2, window_bounds = array<i64: 1, 64, 16>}]} {
    %c0 = arith.constant 0 : index
    %c0_0 = arith.constant 0 : index
    %c0_1 = arith.constant 0 : index
    %0 = vector.load %arg3[%c0, %c0_0, %c0_1] : memref<1x64x16xf32, #tpu.memory_space<vmem>>, vector<1x64x16xf32>
    %1 = vector.shape_cast %0 : vector<1x64x16xf32> to vector<64x16xf32>
    %c0_2 = arith.constant 0 : index
    %c0_3 = arith.constant 0 : index
    %c0_4 = arith.constant 0 : index
    %2 = vector.load %arg2[%c0_2, %c0_3, %c0_4] : memref<2x128x64xf32, #tpu.memory_space<vmem>>, vector<1x128x64xf32>
    %3 = vector.shape_cast %2 : vector<1x128x64xf32> to vector<128x64xf32>
    %cst = arith.constant dense<0.000000e+00> : vector<128x16xf32>
    %4 = tpu.matmul %3, %1, %cst {dimension_numbers = #tpu.dot_dimension_numbers<[1], [0], [0], [1], [0, 0, 1, 1], [], []>} : vector<128x64xf32>, vector<64x16xf32>, vector<128x16xf32> -> vector<128x16xf32>
    %5 = vector.extract_strided_slice %4 {offsets = [0, 0], sizes = [64, 16], strides = [1, 1]} : vector<128x16xf32> to vector<64x16xf32>
    %6 = vector.extract_strided_slice %4 {offsets = [64, 0], sizes = [64, 16], strides = [1, 1]} : vector<128x16xf32> to vector<64x16xf32>
    %7 = arith.mulf %5, %6 : vector<64x16xf32>
    %c1 = arith.constant 1 : index
    %c0_5 = arith.constant 0 : index
    %c0_6 = arith.constant 0 : index
    %8 = vector.load %arg2[%c1, %c0_5, %c0_6] : memref<2x128x64xf32, #tpu.memory_space<vmem>>, vector<1x128x64xf32>
    %9 = vector.shape_cast %8 : vector<1x128x64xf32> to vector<128x64xf32>
    %cst_7 = arith.constant dense<0.000000e+00> : vector<128x16xf32>
    %10 = tpu.matmul %9, %1, %cst_7 {dimension_numbers = #tpu.dot_dimension_numbers<[1], [0], [0], [1], [0, 0, 1, 1], [], []>} : vector<128x64xf32>, vector<64x16xf32>, vector<128x16xf32> -> vector<128x16xf32>
    %11 = vector.extract_strided_slice %10 {offsets = [0, 0], sizes = [64, 16], strides = [1, 1]} : vector<128x16xf32> to vector<64x16xf32>
    %12 = vector.extract_strided_slice %10 {offsets = [64, 0], sizes = [64, 16], strides = [1, 1]} : vector<128x16xf32> to vector<64x16xf32>
    %13 = arith.mulf %11, %12 : vector<64x16xf32>
    %14 = arith.addf %7, %13 : vector<64x16xf32>
    %c0_8 = arith.constant 0 : index
    %c0_9 = arith.constant 0 : index
    %c0_10 = arith.constant 0 : index
    %15 = vector.load %arg4[%c0_8, %c0_9, %c0_10] : memref<1x64x16xf32, #tpu.memory_space<vmem>>, vector<1x64x16xf32>
    %16 = vector.shape_cast %15 : vector<1x64x16xf32> to vector<64x16xf32>
    %17 = vector.shape_cast %14 : vector<64x16xf32> to vector<1x64x16xf32>
    tpu.vector_store %arg4[%c0_8, %c0_9, %c0_10], %17 {strides = array<i32>} : memref<1x64x16xf32, #tpu.memory_space<vmem>>, vector<1x64x16xf32>,
    return
  }
  func.func @transform_0(%arg0: i32, %arg1: i32) -> (i32, i32, i32) {
    %c0_i32 = arith.constant 0 : i32
    %c0_i32_0 = arith.constant 0 : i32
    %c0_i32_1 = arith.constant 0 : i32
    %c0_i32_2 = arith.constant 0 : i32
    return %c0_i32, %c0_i32_0, %c0_i32_1 : i32, i32, i32
  }
  func.func @transform_1(%arg0: i32, %arg1: i32) -> (i32, i32, i32) {
    %c0_i32 = arith.constant 0 : i32
    %c0_i32_0 = arith.constant 0 : i32
    return %arg0, %c0_i32, %arg1 : i32, i32, i32
  }
  func.func @transform_2(%arg0: i32, %arg1: i32) -> (i32, i32, i32) {
    %c0_i32 = arith.constant 0 : i32
    %c0_i32_0 = arith.constant 0 : i32
    return %arg0, %c0_i32, %arg1 : i32, i32, i32
  }
}

</mosaic_0001>

<llo_original>
// kernel: tpu_custom_call.1
$region0: #{tpu_custom_call.1}
  #allocation0 [shape = 'u32[]', space=smem, size = 0x4, offset = 0x4, fixed_abs, tag = 'smem constant byte address 0x4 - core index']
  #allocation1 [shape = 'u32[72,128]{1,0:T(1,128)}', space=vmem, size = 0x9000, scoped, tag = 'internal scratch']
  %s0 = inlined_call_operand.vmem [shape: f32[2,128,64], index: 0, kind: input, shape index: {}]
  %s1 = inlined_call_operand.vmem [shape: f32[2,64,16], index: 1, kind: input, shape index: {}]
  %s2 = inlined_call_operand.vmem [shape: f32[2,64,16], index: 2, kind: output, shape index: {}]
  %s3 = sld [smem:[#allocation0]]
  $region41: #{tpu_custom_call.1} parent=0
    _
  %s5 = ssub.s32 1, %s3
  %s6 = scalar_select 0, %s5, %s3
  loop: start=0, step=1, limit=4
  $region2: #{tpu_custom_call.1} parent=0 // loop_pre_header
    _
  $region3: #{tpu_custom_call.1} parent=0 // loop_header
    %s8 = sphi 0, %s12
    %p9 = scmp.ge.s32.totalorder %s8, 4
    %s15 = sphi 0, %s27
    %s16 = sphi 0, %s23
    %s17 = sphi 0, %s15
    %s18 = sphi 0, %s16
    %s19 = sphi 0, %s17
    %s20 = sphi 0, %s18
    %s28 = sphi 0, %s28
    %s30 = sphi 0, %s28
    %s31 = sphi 0, %s30
    %s45 = sphi 0, %s31
    %s53 = sphi 0, %s55
    %s56 = sphi 0, %s53
    %s57 = sphi 0, %s56
    %s73 = sphi 0, %s57
    %s81 = sphi 0, %s83
    %s84 = sphi 0, %s81
    %s85 = sphi 0, %s84
    %s101 = sphi 0, %s85
  $region4: #{tpu_custom_call.1} parent=0 // loop_header_branch
    %11 = sbr.rel (%p9) target = $region8
  $region5: #{tpu_custom_call.1} parent=0 // loop_body
    %s13 = ssub.s32 %s8, 1
    %s14 = ssub.s32 %s8, 2
    %s21 = sadd.s32 1, %s16
    %p22 = scmp.ge.s32.totalorder %s21, 1
    %s23 = scalar_select %p22, 0, %s21
    %s24 = sadd.s32 1, %s15
    %s25 = scalar_select %p22, %s24, %s15
    %p26 = scmp.ge.s32.totalorder %s25, 2
    %s27 = scalar_select %p26, 0, %s25
    %s29 = sadd.s32 %s28, 1
    %p32 = scmp.eq.s32.totalorder %s8, 1
    %p33 = scmp.ne.s32.totalorder %s28, %s30
    %p34 = scmp.eq.s32.totalorder %s8, 0
    %p35 = por %p33, %p34
    %p36 = scmp.ne.s32.totalorder %s28, %s30
    %p37 = scmp.eq.s32.totalorder %s13, 1
    %p38 = por %p36, %p37
    %p39 = scmp.ne.s32.totalorder %s30, %s31
    %p40 = scmp.eq.s32.totalorder %s13, 0
    %p41 = por %p39, %p40
    %p42 = scmp.ne.s32.totalorder %s30, %s31
    %p43 = scmp.eq.s32.totalorder %s14, 1
    %p44 = por %p42, %p43
    %p46 = scmp.ne.s32.totalorder %s31, %s45
    %p47 = scmp.eq.s32.totalorder %s14, 0
    %p48 = por %p46, %p47
    %s49 = ssub.s32 %s15, %s27
    %s50 = ssub.s32 %s16, %s23
    %s51 = sor.u32 %s49, %s50
    %p52 = scmp.eq.s32.totalorder %s51, 0
    %s54 = sadd.s32 %s53, 1
    %s55 = scalar_select %p52, %s53, %s54
    %p58 = pneg %p52
    %p59 = scmp.eq.s32.totalorder %s8, 1
    %p60 = por %p58, %p59
    %p61 = scmp.ne.s32.totalorder %s53, %s56
    %p62 = scmp.eq.s32.totalorder %s8, 0
    %p63 = por %p61, %p62
    %p64 = scmp.ne.s32.totalorder %s53, %s56
    %p65 = scmp.eq.s32.totalorder %s13, 1
    %p66 = por %p64, %p65
    %p67 = scmp.ne.s32.totalorder %s56, %s57
    %p68 = scmp.eq.s32.totalorder %s13, 0
    %p69 = por %p67, %p68
    %p70 = scmp.ne.s32.totalorder %s56, %s57
    %p71 = scmp.eq.s32.totalorder %s14, 1
    %p72 = por %p70, %p71
    %p74 = scmp.ne.s32.totalorder %s57, %s73
    %p75 = scmp.eq.s32.totalorder %s14, 0
    %p76 = por %p74, %p75
    %s77 = ssub.s32 %s15, %s27
    %s78 = ssub.s32 %s16, %s23
    %s79 = sor.u32 %s77, %s78
    %p80 = scmp.eq.s32.totalorder %s79, 0
    %s82 = sadd.s32 %s81, 1
    %s83 = scalar_select %p80, %s81, %s82
    %p86 = pneg %p80
    %p87 = scmp.eq.s32.totalorder %s8, 1
    %p88 = por %p86, %p87
    %p89 = scmp.ne.s32.totalorder %s81, %s84
    %p90 = scmp.eq.s32.totalorder %s8, 0
    %p91 = por %p89, %p90
    %p92 = scmp.ne.s32.totalorder %s81, %s84
    %p93 = scmp.eq.s32.totalorder %s13, 1
    %p94 = por %p92, %p93
    %p95 = scmp.ne.s32.totalorder %s84, %s85
    %p96 = scmp.eq.s32.totalorder %s13, 0
    %p97 = por %p95, %p96
    %p98 = scmp.ne.s32.totalorder %s84, %s85
    %p99 = scmp.eq.s32.totalorder %s14, 1
    %p100 = por %p98, %p99
    %p102 = scmp.ne.s32.totalorder %s85, %s101
    %p103 = scmp.eq.s32.totalorder %s14, 0
    %p104 = por %p102, %p103
    %p105 = scmp.le.s32.totalorder 1, %s8
    %p106 = scmp.lt.s32.totalorder %s8, 3
    %p107 = pnand %p105, %p106
    %p108 = pneg %p107
    // Predicated region
    $region9: #{tpu_custom_call.1} parent=5 // pred_check
      _
    $region10: #{tpu_custom_call.1} parent=5 // pred_check_branch
      %110 = sbr.rel (%p107) target = $region12
    $region11: #{tpu_custom_call.1} parent=5 // pred_region
      %s111 = ssub.s32 %s8, 1
      // Predicated region
      $region13: #{tpu_custom_call.1} parent=11 // pred_check
        %p112 = pneg %p41
      $region14: #{tpu_custom_call.1} parent=11 // pred_check_branch
        %114 = sbr.rel (%p112) target = $region16
      $region15: #{tpu_custom_call.1} parent=11 // pred_region
        _
      $region16: #{tpu_custom_call.1} parent=11 // pred_fallthru
        _
    $region12: #{tpu_custom_call.1} parent=5 // pred_fallthru
      _
    %p115 = scmp.lt.s32.totalorder %s8, 2
    // Predicated region
    $region17: #{tpu_custom_call.1} parent=5 // pred_check
      %p116 = pneg %p115
    $region18: #{tpu_custom_call.1} parent=5 // pred_check_branch
      %118 = sbr.rel (%p116) target = $region20
    $region19: #{tpu_custom_call.1} parent=5 // pred_region
      // Predicated region
      $region21: #{tpu_custom_call.1} parent=19 // pred_check
        %p119 = pneg %p63
      $region22: #{tpu_custom_call.1} parent=19 // pred_check_branch
        %121 = sbr.rel (%p119) target = $region24
      $region23: #{tpu_custom_call.1} parent=19 // pred_region
        %p122 = scmp.lt.s32.totalorder %s15, 1
        %s123 = scalar_select %p122, %s15, 1
        %p124 = scmp.lt.s32.totalorder %s16, 0
        %s125 = scalar_select %p124, %s16, 0
        %s126 = smul.addr %s123, 8
        %s127 = sadd.s32 %s125, %s126
        %s128 = smul.addr %s127, 8
        %s129 = scalar_lea.vmem %s1, %s128
      $region24: #{tpu_custom_call.1} parent=19 // pred_fallthru
        _
    $region20: #{tpu_custom_call.1} parent=5 // pred_fallthru
      _
    %p130 = scmp.le.s32.totalorder 1, %s8
    %p131 = scmp.lt.s32.totalorder %s8, 3
    %p132 = pnand %p130, %p131
    %p133 = pneg %p132
    // Predicated region
    $region25: #{tpu_custom_call.1} parent=5 // pred_check
      _
    $region26: #{tpu_custom_call.1} parent=5 // pred_check_branch
      %135 = sbr.rel (%p132) target = $region28
    $region27: #{tpu_custom_call.1} parent=5 // pred_region
      %s136 = ssub.s32 %s8, 1
      %p137 = pneg %p41
      %p138 = pneg %p38
      %p139 = scmp.lt.s32.totalorder %s17, 1
      %s140 = scalar_select %p139, %s17, 1
      %p141 = scmp.lt.s32.totalorder %s18, 0
      %s142 = scalar_select %p141, %s18, 0
      %s143 = smul.addr %s140, 8
      %s144 = sadd.s32 %s142, %s143
      %s145 = smul.addr %s144, 8
      %s146 = scalar_lea.vmem %s1, %s145
      %p147 = pneg %p69
      %p148 = pneg %p66
      %p149 = pneg %p97
      %p150 = pneg %p94
      %p151 = scmp.lt.s32.totalorder %s17, 1
      %s152 = scalar_select %p151, %s17, 1
      %p153 = scmp.lt.s32.totalorder %s18, 0
      %s154 = scalar_select %p153, %s18, 0
      %s155 = smul.addr %s152, 8
      %s156 = sadd.s32 %s154, %s155
      %s157 = smul.addr %s156, 8
      %s158 = scalar_lea.vmem %s2, %s157
      %p159 = scmp.lt.s32.totalorder %s17, 1
      %s160 = scalar_select %p159, %s17, 1
      %p161 = scmp.lt.s32.totalorder %s18, 0
      %s162 = scalar_select %p161, %s18, 0
      %s163 = smul.addr %s160, 8
      %s164 = sadd.s32 %s162, %s163
      %s165 = smul.addr %s164, 8
      %s166 = scalar_lea.vmem %s1, %s165
      %p167 = scmp.lt.s32.totalorder %s17, 1
      %s168 = scalar_select %p167, %s17, 1
      %p169 = scmp.lt.s32.totalorder %s18, 0
      %s170 = scalar_select %p169, %s18, 0
      %s171 = smul.addr %s168, 8
      %s172 = sadd.s32 %s170, %s171
      %s173 = smul.addr %s172, 8
      %s174 = scalar_lea.vmem %s2, %s173
      %v175 = vld [vmem:[%s166] sm:$0xff]
      %v176 = vld [vmem:[%s166 + $0x8] sm:$0xff]
      %v177 = vld [vmem:[%s166 + $0x10] sm:$0xff]
      %v178 = vld [vmem:[%s166 + $0x18] sm:$0xff]
      %v179 = vld [vmem:[%s166 + $0x20] sm:$0xff]
      %v180 = vld [vmem:[%s166 + $0x28] sm:$0xff]
      %v181 = vld [vmem:[%s166 + $0x30] sm:$0xff]
      %v182 = vld [vmem:[%s166 + $0x38] sm:$0xff]
      %v183 = vld [vmem:[%s0] sm:$0xff]
      %v184 = vld [vmem:[%s0 + $0x8] sm:$0xff]
      %v185 = vld [vmem:[%s0 + $0x10] sm:$0xff]
      %v186 = vld [vmem:[%s0 + $0x18] sm:$0xff]
      %v187 = vld [vmem:[%s0 + $0x20] sm:$0xff]
      %v188 = vld [vmem:[%s0 + $0x28] sm:$0xff]
      %v189 = vld [vmem:[%s0 + $0x30] sm:$0xff]
      %v190 = vld [vmem:[%s0 + $0x38] sm:$0xff]
      %v191 = vld [vmem:[%s0 + $0x40] sm:$0xff]
      %v192 = vld [vmem:[%s0 + $0x48] sm:$0xff]
      %v193 = vld [vmem:[%s0 + $0x50] sm:$0xff]
      %v194 = vld [vmem:[%s0 + $0x58] sm:$0xff]
      %v195 = vld [vmem:[%s0 + $0x60] sm:$0xff]
      %v196 = vld [vmem:[%s0 + $0x68] sm:$0xff]
      %v197 = vld [vmem:[%s0 + $0x70] sm:$0xff]
      %v198 = vld [vmem:[%s0 + $0x78] sm:$0xff]
      %vm199 = vcmask 523264
      %v201 = vsel %vm199, %v183, 0
      %v204 = vsel %vm199, %v184, 0
      %v207 = vsel %vm199, %v185, 0
      %v210 = vsel %vm199, %v186, 0
      %v213 = vsel %vm199, %v187, 0
      %v216 = vsel %vm199, %v188, 0
      %v219 = vsel %vm199, %v189, 0
      %v222 = vsel %vm199, %v190, 0
      %v225 = vsel %vm199, %v191, 0
      %v228 = vsel %vm199, %v192, 0
      %v231 = vsel %vm199, %v193, 0
      %v234 = vsel %vm199, %v194, 0
      %v237 = vsel %vm199, %v195, 0
      %v240 = vsel %vm199, %v196, 0
      %v243 = vsel %vm199, %v197, 0
      %v246 = vsel %vm199, %v198, 0
      %248 = vmatpush.msra.mxu0 0.0
      %249 = vmatpush.msra.mxu0 0.0
      %250 = vmatpush.msra.mxu0 0.0
      %251 = vmatpush.msra.mxu0 0.0
      %252 = vmatpush.msra.mxu0 0.0
      %253 = vmatpush.msra.mxu0 0.0
      %254 = vmatpush.msra.mxu0 0.0
      %255 = vmatpush.msra.mxu0 0.0
      %256 = vmatpush.msra.mxu0 %v182
      %257 = vmatpush.msra.mxu0 %v181
      %258 = vmatpush.msra.mxu0 %v180
      %259 = vmatpush.msra.mxu0 %v179
      %260 = vmatpush.msra.mxu0 %v178
      %261 = vmatpush.msra.mxu0 %v177
      %262 = vmatpush.msra.mxu0 %v176
      %263 = vmatpush.msra.mxu0 %v175
      %264 = vmatmul.f32.gmra.mxu0 %v201
      %v265 = vpop.f32.mrf.mxu0
      %v266 = vadd.f32 0.0, %v265
      %267 = vmatmul.f32.gmra.mxu0 %v204
      %v268 = vpop.f32.mrf.mxu0
      %v269 = vadd.f32 0.0, %v268
      %270 = vmatmul.f32.gmra.mxu0 %v207
      %v271 = vpop.f32.mrf.mxu0
      %v272 = vadd.f32 0.0, %v271
      %273 = vmatmul.f32.gmra.mxu0 %v210
      %v274 = vpop.f32.mrf.mxu0
      %v275 = vadd.f32 0.0, %v274
      %276 = vmatmul.f32.gmra.mxu0 %v213
      %v277 = vpop.f32.mrf.mxu0
      %v278 = vadd.f32 0.0, %v277
      %279 = vmatmul.f32.gmra.mxu0 %v216
      %v280 = vpop.f32.mrf.mxu0
      %v281 = vadd.f32 0.0, %v280
      %282 = vmatmul.f32.gmra.mxu0 %v219
      %v283 = vpop.f32.mrf.mxu0
      %v284 = vadd.f32 0.0, %v283
      %285 = vmatmul.f32.gmra.mxu0 %v222
      %v286 = vpop.f32.mrf.mxu0
      %v287 = vadd.f32 0.0, %v286
      %288 = vmatmul.f32.gmra.mxu0 %v225
      %v289 = vpop.f32.mrf.mxu0
      %v290 = vadd.f32 0.0, %v289
      %291 = vmatmul.f32.gmra.mxu0 %v228
      %v292 = vpop.f32.mrf.mxu0
      %v293 = vadd.f32 0.0, %v292
      %294 = vmatmul.f32.gmra.mxu0 %v231
      %v295 = vpop.f32.mrf.mxu0
      %v296 = vadd.f32 0.0, %v295
      %297 = vmatmul.f32.gmra.mxu0 %v234
      %v298 = vpop.f32.mrf.mxu0
      %v299 = vadd.f32 0.0, %v298
      %300 = vmatmul.f32.gmra.mxu0 %v237
      %v301 = vpop.f32.mrf.mxu0
      %v302 = vadd.f32 0.0, %v301
      %303 = vmatmul.f32.gmra.mxu0 %v240
      %v304 = vpop.f32.mrf.mxu0
      %v305 = vadd.f32 0.0, %v304
      %306 = vmatmul.f32.gmra.mxu0 %v243
      %v307 = vpop.f32.mrf.mxu0
      %v308 = vadd.f32 0.0, %v307
      %309 = vmatmul.f32.gmra.mxu0 %v246
      %v310 = vpop.f32.mrf.mxu0
      %v311 = vadd.f32 0.0, %v310
      %312 = vdwg.mxu0
      %v313 = vmul.f32 %v266, %v290
      %v314 = vmul.f32 %v269, %v293
      %v315 = vmul.f32 %v272, %v296
      %v316 = vmul.f32 %v275, %v299
      %v317 = vmul.f32 %v278, %v302
      %v318 = vmul.f32 %v281, %v305
      %v319 = vmul.f32 %v284, %v308
      %v320 = vmul.f32 %v287, %v311
      %s321 = scalar_lea.vmem %s0, 128
      %v322 = vld [vmem:[%s321] sm:$0xff]
      %v323 = vld [vmem:[%s321 + $0x8] sm:$0xff]
      %v324 = vld [vmem:[%s321 + $0x10] sm:$0xff]
      %v325 = vld [vmem:[%s321 + $0x18] sm:$0xff]
      %v326 = vld [vmem:[%s321 + $0x20] sm:$0xff]
      %v327 = vld [vmem:[%s321 + $0x28] sm:$0xff]
      %v328 = vld [vmem:[%s321 + $0x30] sm:$0xff]
      %v329 = vld [vmem:[%s321 + $0x38] sm:$0xff]
      %v330 = vld [vmem:[%s321 + $0x40] sm:$0xff]
      %v331 = vld [vmem:[%s321 + $0x48] sm:$0xff]
      %v332 = vld [vmem:[%s321 + $0x50] sm:$0xff]
      %v333 = vld [vmem:[%s321 + $0x58] sm:$0xff]
      %v334 = vld [vmem:[%s321 + $0x60] sm:$0xff]
      %v335 = vld [vmem:[%s321 + $0x68] sm:$0xff]
      %v336 = vld [vmem:[%s321 + $0x70] sm:$0xff]
      %v337 = vld [vmem:[%s321 + $0x78] sm:$0xff]
      %v339 = vsel %vm199, %v322, 0
      %v342 = vsel %vm199, %v323, 0
      %v345 = vsel %vm199, %v324, 0
      %v348 = vsel %vm199, %v325, 0
      %v351 = vsel %vm199, %v326, 0
      %v354 = vsel %vm199, %v327, 0
      %v357 = vsel %vm199, %v328, 0
      %v360 = vsel %vm199, %v329, 0
      %v363 = vsel %vm199, %v330, 0
      %v366 = vsel %vm199, %v331, 0
      %v369 = vsel %vm199, %v332, 0
      %v372 = vsel %vm199, %v333, 0
      %v375 = vsel %vm199, %v334, 0
      %v378 = vsel %vm199, %v335, 0
      %v381 = vsel %vm199, %v336, 0
      %v384 = vsel %vm199, %v337, 0
      %386 = vmatpush.msra.mxu0 0.0
      %387 = vmatpush.msra.mxu0 0.0
      %388 = vmatpush.msra.mxu0 0.0
      %389 = vmatpush.msra.mxu0 0.0
      %390 = vmatpush.msra.mxu0 0.0
      %391 = vmatpush.msra.mxu0 0.0
      %392 = vmatpush.msra.mxu0 0.0
      %393 = vmatpush.msra.mxu0 0.0
      %394 = vmatpush.msra.mxu0 %v182
      %395 = vmatpush.msra.mxu0 %v181
      %396 = vmatpush.msra.mxu0 %v180
      %397 = vmatpush.msra.mxu0 %v179
      %398 = vmatpush.msra.mxu0 %v178
      %399 = vmatpush.msra.mxu0 %v177
      %400 = vmatpush.msra.mxu0 %v176
      %401 = vmatpush.msra.mxu0 %v175
      %402 = vmatmul.f32.gmra.mxu0 %v339
      %v403 = vpop.f32.mrf.mxu0
      %v404 = vadd.f32 0.0, %v403
      %405 = vmatmul.f32.gmra.mxu0 %v342
      %v406 = vpop.f32.mrf.mxu0
      %v407 = vadd.f32 0.0, %v406
      %408 = vmatmul.f32.gmra.mxu0 %v345
      %v409 = vpop.f32.mrf.mxu0
      %v410 = vadd.f32 0.0, %v409
      %411 = vmatmul.f32.gmra.mxu0 %v348
      %v412 = vpop.f32.mrf.mxu0
      %v413 = vadd.f32 0.0, %v412
      %414 = vmatmul.f32.gmra.mxu0 %v351
      %v415 = vpop.f32.mrf.mxu0
      %v416 = vadd.f32 0.0, %v415
      %417 = vmatmul.f32.gmra.mxu0 %v354
      %v418 = vpop.f32.mrf.mxu0
      %v419 = vadd.f32 0.0, %v418
      %420 = vmatmul.f32.gmra.mxu0 %v357
      %v421 = vpop.f32.mrf.mxu0
      %v422 = vadd.f32 0.0, %v421
      %423 = vmatmul.f32.gmra.mxu0 %v360
      %v424 = vpop.f32.mrf.mxu0
      %v425 = vadd.f32 0.0, %v424
      %426 = vmatmul.f32.gmra.mxu0 %v363
      %v427 = vpop.f32.mrf.mxu0
      %v428 = vadd.f32 0.0, %v427
      %429 = vmatmul.f32.gmra.mxu0 %v366
      %v430 = vpop.f32.mrf.mxu0
      %v431 = vadd.f32 0.0, %v430
      %432 = vmatmul.f32.gmra.mxu0 %v369
      %v433 = vpop.f32.mrf.mxu0
      %v434 = vadd.f32 0.0, %v433
      %435 = vmatmul.f32.gmra.mxu0 %v372
      %v436 = vpop.f32.mrf.mxu0
      %v437 = vadd.f32 0.0, %v436
      %438 = vmatmul.f32.gmra.mxu0 %v375
      %v439 = vpop.f32.mrf.mxu0
      %v440 = vadd.f32 0.0, %v439
      %441 = vmatmul.f32.gmra.mxu0 %v378
      %v442 = vpop.f32.mrf.mxu0
      %v443 = vadd.f32 0.0, %v442
      %444 = vmatmul.f32.gmra.mxu0 %v381
      %v445 = vpop.f32.mrf.mxu0
      %v446 = vadd.f32 0.0, %v445
      %447 = vmatmul.f32.gmra.mxu0 %v384
      %v448 = vpop.f32.mrf.mxu0
      %v449 = vadd.f32 0.0, %v448
      %450 = vdwg.mxu0
      %v451 = vmul.f32 %v404, %v428
      %v452 = vmul.f32 %v407, %v431
      %v453 = vmul.f32 %v410, %v434
      %v454 = vmul.f32 %v413, %v437
      %v455 = vmul.f32 %v416, %v440
      %v456 = vmul.f32 %v419, %v443
      %v457 = vmul.f32 %v422, %v446
      %v458 = vmul.f32 %v425, %v449
      %v459 = vadd.f32 %v313, %v451
      %v460 = vadd.f32 %v314, %v452
      %v461 = vadd.f32 %v315, %v453
      %v462 = vadd.f32 %v316, %v454
      %v463 = vadd.f32 %v317, %v455
      %v464 = vadd.f32 %v318, %v456
      %v465 = vadd.f32 %v319, %v457
      %v466 = vadd.f32 %v320, %v458
      %vm467 = vcmask 130048
      %468 = vst.msk [vmem:[%s174] sm:$0xff] %vm467, %v459
      %469 = vst.msk [vmem:[%s174 + $0x8] sm:$0xff] %vm467, %v460
      %470 = vst.msk [vmem:[%s174 + $0x10] sm:$0xff] %vm467, %v461
      %471 = vst.msk [vmem:[%s174 + $0x18] sm:$0xff] %vm467, %v462
      %472 = vst.msk [vmem:[%s174 + $0x20] sm:$0xff] %vm467, %v463
      %473 = vst.msk [vmem:[%s174 + $0x28] sm:$0xff] %vm467, %v464
      %474 = vst.msk [vmem:[%s174 + $0x30] sm:$0xff] %vm467, %v465
      %475 = vst.msk [vmem:[%s174 + $0x38] sm:$0xff] %vm467, %v466
      %p476 = scmp.lt.s32.totalorder %s17, 1
      %s477 = scalar_select %p476, %s17, 1
      %p478 = scmp.lt.s32.totalorder %s18, 0
      %s479 = scalar_select %p478, %s18, 0
      %s480 = smul.addr %s477, 8
      %s481 = sadd.s32 %s479, %s480
      %s482 = smul.addr %s481, 8
      %s483 = scalar_lea.vmem %s2, %s482
      // Predicated region
      $region29: #{tpu_custom_call.1} parent=27 // pred_check
        %p484 = pneg %p94
      $region30: #{tpu_custom_call.1} parent=27 // pred_check_branch
        %486 = sbr.rel (%p484) target = $region32
      $region31: #{tpu_custom_call.1} parent=27 // pred_region
        _
      $region32: #{tpu_custom_call.1} parent=27 // pred_fallthru
        _
    $region28: #{tpu_custom_call.1} parent=5 // pred_fallthru
      _
    %p487 = scmp.le.s32.totalorder 2, %s8
    // Predicated region
    $region33: #{tpu_custom_call.1} parent=5 // pred_check
      %p488 = pneg %p487
    $region34: #{tpu_custom_call.1} parent=5 // pred_check_branch
      %490 = sbr.rel (%p488) target = $region36
    $region35: #{tpu_custom_call.1} parent=5 // pred_region
      %s491 = ssub.s32 %s8, 2
      // Predicated region
      $region37: #{tpu_custom_call.1} parent=35 // pred_check
        %p492 = pneg %p100
      $region38: #{tpu_custom_call.1} parent=35 // pred_check_branch
        %494 = sbr.rel (%p492) target = $region40
      $region39: #{tpu_custom_call.1} parent=35 // pred_region
        %p495 = scmp.lt.s32.totalorder %s19, 1
        %s496 = scalar_select %p495, %s19, 1
        %p497 = scmp.lt.s32.totalorder %s20, 0
        %s498 = scalar_select %p497, %s20, 0
        %s499 = smul.addr %s496, 8
        %s500 = sadd.s32 %s498, %s499
        %s501 = smul.addr %s500, 8
        %s502 = scalar_lea.vmem %s2, %s501
      $region40: #{tpu_custom_call.1} parent=35 // pred_fallthru
        _
    $region36: #{tpu_custom_call.1} parent=5 // pred_fallthru
      _
  $region6: #{tpu_custom_call.1} parent=0 // loop_footer
    %s12 = sadd.s32 1, %s8
  $region7: #{tpu_custom_call.1} parent=0 // loop_footer_branch
    %7 = sbr.rel target = $region3
  $region8: #{tpu_custom_call.1} parent=0 // loop_exit
    _

</llo_original>
